<compile_context>
chip_gen: v5e
topology: v5e:2x2
jax: 0.10.0
libtpu: 0.0.40
codegen_flags: <defaults>
</compile_context>

<pallas_src>
import functools

import jax
import jax.numpy as jnp
from jax import lax
from jax.experimental import pallas as pl
from jax.experimental.pallas import tpu as pltpu


def _cdiv(a, b):
    return -(-a // b)


def _round_up(a, b):
    return _cdiv(a, b) * b


# ---------------------------------------------------------------------------
# Kernel
# ---------------------------------------------------------------------------
def shortcut_kernel(x_ref, o_ref, *, pad):
    # x_ref: (bn, C, h_blk, 2*W)  -- each lane row = [even H row | odd H row]
    # o_ref: (bn, C + 2*pad, h_blk, w_out)
    bn, C, hb, k2 = x_ref.shape
    w_out = o_ref.shape[-1]

    # One-hot (2W, w_out) selector: column j picks input element 2j, i.e. the
    # even-W columns of the even-H row.  The gather runs on the idle MXU and is
    # exact (each output = 1.0 * x + 0.0 * rest) for finite inputs.
    r = lax.broadcasted_iota(jnp.int32, (k2, w_out), 0)
    c = lax.broadcasted_iota(jnp.int32, (k2, w_out), 1)
    sel = (r == 2 * c).astype(jnp.float32)

    m = x_ref[...].reshape(bn * C * hb, k2).astype(jnp.float32)
    sub = jnp.dot(m, sel, preferred_element_type=jnp.float32)      # (rows, w_out)
    sub = sub.reshape(bn, C, hb, w_out).astype(o_ref.dtype)

    if pad > 0:                                # channel zero-pad (major dim slices)
        zeros = jnp.zeros((bn, pad, hb, w_out), dtype=o_ref.dtype)
        o_ref[:, :pad] = zeros
        o_ref[:, pad + C:] = zeros
    o_ref[:, pad:pad + C] = sub


# ---------------------------------------------------------------------------
# Block / VMEM sizing
# ---------------------------------------------------------------------------
def _sublane_tile(itemsize):
    # f32 tiles (8,128); sub-32-bit dtypes pack 16/32 rows per sublane tile.
    return 8 * max(1, 4 // max(1, itemsize))


def _block_bytes(bn, C, h_blk, k2, c_out, w_out, itemsize):
    sl = _sublane_tile(itemsize)
    in_elems = bn * C * _round_up(h_blk, sl) * _round_up(k2, 128)
    out_elems = bn * c_out * _round_up(h_blk, sl) * _round_up(w_out, 128)
    return (in_elems + out_elems) * itemsize


def _vmem_limit_bytes():
    try:
        cap = pltpu.get_tpu_info().vmem_capacity_bytes
    except Exception:
        cap = 64 * 1024 * 1024          # conservative: v7x physical VMEM
    return int(min(cap // 2, 64 * 1024 * 1024))


def _pick_blocks(N, C, h_out, k2, c_out, w_out, itemsize, vmem_limit):
    # ~1/5 of the scoped limit for one step's (in + out) blocks leaves headroom
    # for double-buffering plus the f32 matmul intermediates.
    budget = vmem_limit // 5

    def fits(bn, h_blk):
        return _block_bytes(bn, C, h_blk, k2, c_out, w_out, itemsize) <= budget

    # h-tiling fallback: only needed when a single batch element is too big
    # (hit first on v7x).  h_blk must be a multiple of 8 or equal to h_out.
    h_blk = h_out
    if not fits(1, h_out):
        h_blk = 8
        for m in range(h_out // 8, 0, -1):
            if fits(1, m * 8):
                h_blk = m * 8
                break

    per_elem = _block_bytes(1, C, h_blk, k2, c_out, w_out, itemsize)
    cap = max(1, min(N, budget // max(per_elem, 1)))

    if N <= 1:
        return 1, h_blk

    # Few, large batch steps; prefer an even step count for v7x's 2 TensorCores.
    min_steps = max(2, _cdiv(N, cap))
    bn = _cdiv(N, min_steps)
    for steps in range(min_steps, 2 * min_steps + 3):
        cand = _cdiv(N, steps)
        if cand <= cap and _cdiv(N, cand) % 2 == 0:
            bn = cand
            break
    return bn, h_blk


# ---------------------------------------------------------------------------
# Wrapper
# ---------------------------------------------------------------------------
def lambda_shortcut(x_nchw, planes):
    """JAX/Pallas equivalent of the ResNet option-A shortcut lambda."""
    pad = planes // 4
    N, C, H, W = x_nchw.shape
    h_out = (H + 1) // 2
    w_out = (W + 1) // 2
    c_out = C + 2 * pad

    x = x_nchw
    if H % 2:        # only for odd H: make the row-pair reshape below legal
        x = jnp.pad(x, ((0, 0), (0, 0), (0, 1), (0, 0)))
    k2 = 2 * W
    # Free reshape: rows h=2i and h=2i+1 of a channel become one 2W lane row;
    # the kernel's one-hot matmul picks elements 0,2,... (even-H, even-W).
    x3 = x.reshape(N, C, h_out, k2)

    itemsize = x_nchw.dtype.itemsize
    vmem_limit = _vmem_limit_bytes()
    bn, h_blk = _pick_blocks(N, C, h_out, k2, c_out, w_out, itemsize, vmem_limit)
    grid = (_cdiv(N, bn), _cdiv(h_out, h_blk))

    kernel = functools.partial(shortcut_kernel, pad=pad)
    return pl.pallas_call(
        kernel,
        out_shape=jax.ShapeDtypeStruct((N, c_out, h_out, w_out), x_nchw.dtype),
        grid=grid,
        in_specs=[
            pl.BlockSpec((bn, C, h_blk, k2), lambda i, j: (i, 0, j, 0)),
        ],
        out_specs=pl.BlockSpec((bn, c_out, h_blk, w_out),
                               lambda i, j: (i, 0, j, 0)),
        compiler_params=pltpu.CompilerParams(
            dimension_semantics=("parallel", "parallel"),
            vmem_limit_bytes=vmem_limit,
        ),
    )(x3)


if __name__ == "__main__":
    key = jax.random.PRNGKey(0)
    N, C, H, W = 2, 4, 16, 16
    planes = 8                  # option-A shortcut config: pad = planes // 4 = 2
    x = jax.random.normal(key, (N, C, H, W), dtype=jnp.float32)

    out = jax.block_until_ready(lambda_shortcut(x, planes))

    # pure-JAX reference of the PyTorch lambda
    pad = planes // 4
    ref = jnp.pad(x[:, :, ::2, ::2], ((0, 0), (pad, pad), (0, 0), (0, 0)))
    assert out.shape == ref.shape, (out.shape, ref.shape)
    assert out.dtype == ref.dtype, (out.dtype, ref.dtype)
    assert jnp.allclose(out, ref), float(jnp.max(jnp.abs(out - ref)))
    print("KERNEL_OK")
</pallas_src>

<mosaic_0001>
module attributes {stable_mosaic.version = 11 : i64} {
  func.func @shortcut_kernel(%arg0: i32, %arg1: i32, %arg2: memref<1x4x8x32xf32, #tpu.memory_space<vmem>>, %arg3: memref<1x8x8x8xf32, #tpu.memory_space<vmem>>) attributes {dimension_semantics = [#tpu.dimension_semantics<parallel>, #tpu.dimension_semantics<parallel>], iteration_bounds = array<i64: 2, 1>, scalar_prefetch = 0 : i64, scratch_operands = 0 : i64, tpu.core_type = #tpu.core_type<tc>, window_params = [{transform_indices = @transform_0, window_bounds = array<i64: 1, 4, 8, 32>}, {transform_indices = @transform_1, window_bounds = array<i64: 1, 8, 8, 8>}]} {
    %0 = tpu.iota {dimensions = array<i32: 0>} : vector<32x8xi32>
    %1 = tpu.iota {dimensions = array<i32: 1>} : vector<32x8xi32>
    %c2_i32 = arith.constant 2 : i32
    %2 = vector.broadcast %c2_i32 : i32 to vector<32x8xi32>
    %3 = arith.muli %2, %1 : vector<32x8xi32>
    %4 = arith.cmpi eq, %0, %3 : vector<32x8xi32>
    %5 = arith.extui %4 : vector<32x8xi1> to vector<32x8xi32>
    %6 = arith.sitofp %5 : vector<32x8xi32> to vector<32x8xf32>
    %c0 = arith.constant 0 : index
    %c0_0 = arith.constant 0 : index
    %c0_1 = arith.constant 0 : index
    %c0_2 = arith.constant 0 : index
    %7 = vector.load %arg2[%c0, %c0_0, %c0_1, %c0_2] : memref<1x4x8x32xf32, #tpu.memory_space<vmem>>, vector<1x4x8x32xf32>
    %8 = vector.shape_cast %7 : vector<1x4x8x32xf32> to vector<32x32xf32>
    %cst = arith.constant dense<0.000000e+00> : vector<32x8xf32>
    %9 = tpu.matmul %8, %6, %cst {dimension_numbers = #tpu.dot_dimension_numbers<[1], [0], [0], [1], [0, 0, 1, 1], [], []>} : vector<32x32xf32>, vector<32x8xf32>, vector<32x8xf32> -> vector<32x8xf32>
    %10 = vector.shape_cast %9 : vector<32x8xf32> to vector<1x4x8x8xf32>
    %cst_3 = arith.constant 0.000000e+00 : f32
    %11 = vector.broadcast %cst_3 : f32 to vector<1x2x8x8xf32>
    %c0_4 = arith.constant 0 : index
    %c0_5 = arith.constant 0 : index
    %c0_6 = arith.constant 0 : index
    %c0_7 = arith.constant 0 : index
    %12 = vector.load %arg3[%c0_4, %c0_5, %c0_6, %c0_7] : memref<1x8x8x8xf32, #tpu.memory_space<vmem>>, vector<1x2x8x8xf32>
    tpu.vector_store %arg3[%c0_4, %c0_5, %c0_6, %c0_7], %11 {strides = array<i32>} : memref<1x8x8x8xf32, #tpu.memory_space<vmem>>, vector<1x2x8x8xf32>,
    %c0_8 = arith.constant 0 : index
    %c6 = arith.constant 6 : index
    %c0_9 = arith.constant 0 : index
    %c0_10 = arith.constant 0 : index
    %13 = vector.load %arg3[%c0_8, %c6, %c0_9, %c0_10] : memref<1x8x8x8xf32, #tpu.memory_space<vmem>>, vector<1x2x8x8xf32>
    tpu.vector_store %arg3[%c0_8, %c6, %c0_9, %c0_10], %11 {strides = array<i32>} : memref<1x8x8x8xf32, #tpu.memory_space<vmem>>, vector<1x2x8x8xf32>,
    %c0_11 = arith.constant 0 : index
    %c2 = arith.constant 2 : index
    %c0_12 = arith.constant 0 : index
    %c0_13 = arith.constant 0 : index
    %14 = vector.load %arg3[%c0_11, %c2, %c0_12, %c0_13] : memref<1x8x8x8xf32, #tpu.memory_space<vmem>>, vector<1x4x8x8xf32>
    tpu.vector_store %arg3[%c0_11, %c2, %c0_12, %c0_13], %10 {strides = array<i32>} : memref<1x8x8x8xf32, #tpu.memory_space<vmem>>, vector<1x4x8x8xf32>,
    return
  }
  func.func @transform_0(%arg0: i32, %arg1: i32) -> (i32, i32, i32, i32) {
    %c0_i32 = arith.constant 0 : i32
    %c0_i32_0 = arith.constant 0 : i32
    %c0_i32_1 = arith.constant 0 : i32
    return %arg0, %c0_i32, %arg1, %c0_i32_0 : i32, i32, i32, i32
  }
  func.func @transform_1(%arg0: i32, %arg1: i32) -> (i32, i32, i32, i32) {
    %c0_i32 = arith.constant 0 : i32
    %c0_i32_0 = arith.constant 0 : i32
    %c0_i32_1 = arith.constant 0 : i32
    return %arg0, %c0_i32, %arg1, %c0_i32_0 : i32, i32, i32, i32
  }
}

</mosaic_0001>

<llo_original>
// kernel: tpu_custom_call.1
$region0: #{tpu_custom_call.1}
  #allocation0 [shape = 'u32[]', space=smem, size = 0x4, offset = 0x4, fixed_abs, tag = 'smem constant byte address 0x4 - core index']
  #allocation1 [shape = 'u32[72,128]{1,0:T(1,128)}', space=vmem, size = 0x9000, scoped, tag = 'internal scratch']
  %s0 = inlined_call_operand.hbm [shape: f32[2,4,8,32], index: 0, kind: input, shape index: {}]
  %s1 = inlined_call_operand.hbm [shape: f32[2,8,8,8], index: 1, kind: output, shape index: {}]
  %s2 = sld [smem:[#allocation0]]
  $region41: #{tpu_custom_call.1} parent=0
    _
  %s4 = ssub.s32 1, %s2
  %s5 = scalar_select 0, %s4, %s2
  $region1: #{tpu_custom_call.1} parent=0
    #allocation2 [shape = 'u8[32768]{0}', space=vmem, size = 0x8000, scoped, tag = 'input window, operand 0']
    #allocation3 [shape = 's32[2]{0}', space=sflag, size = 0x8, scoped, tag = 'scoped memory for tpu_custom_call.1']
    #allocation4 [shape = 's32[2]{0}', space=sflag, size = 0x8, scoped, tag = 'scoped memory for tpu_custom_call.1']
    #allocation5 [shape = 'u8[65536]{0}', space=vmem, size = 0x10000, scoped, tag = 'output window, operand 0']
    %6 = vsyncpa [#allocation3], 0
    %s7 = scalar_lea.sflag [#allocation3], 1
    %8 = vsyncpa %s7, 0
    %9 = vsyncpa [#allocation4], 0
    %s10 = scalar_lea.sflag [#allocation4], 1
    %11 = vsyncpa %s10, 0
    loop: start=0, step=1, limit=4
    $region2: #{tpu_custom_call.1} parent=1 // loop_pre_header
      _
    $region3: #{tpu_custom_call.1} parent=1 // loop_header
      %s13 = sphi 0, %s17
      %p14 = scmp.ge.s32.totalorder %s13, 4
      %s20 = sphi 0, %s32
      %s21 = sphi 0, %s28
      %s22 = sphi 0, %s20
      %s23 = sphi 0, %s21
      %s24 = sphi 0, %s22
      %s25 = sphi 0, %s23
      %s37 = sphi 0, %s39
      %s40 = sphi 0, %s37
      %s41 = sphi 0, %s40
      %s57 = sphi 0, %s41
      %s65 = sphi 0, %s67
      %s68 = sphi 0, %s65
      %s69 = sphi 0, %s68
      %s85 = sphi 0, %s69
    $region4: #{tpu_custom_call.1} parent=1 // loop_header_branch
      %16 = sbr.rel (%p14) target = $region8
    $region5: #{tpu_custom_call.1} parent=1 // loop_body
      %s18 = ssub.s32 %s13, 1
      %s19 = ssub.s32 %s13, 2
      %s26 = sadd.s32 1, %s21
      %p27 = scmp.ge.s32.totalorder %s26, 1
      %s28 = scalar_select %p27, 0, %s26
      %s29 = sadd.s32 1, %s20
      %s30 = scalar_select %p27, %s29, %s20
      %p31 = scmp.ge.s32.totalorder %s30, 2
      %s32 = scalar_select %p31, 0, %s30
      %s33 = ssub.s32 %s20, %s32
      %s34 = ssub.s32 %s21, %s28
      %s35 = sor.u32 %s33, %s34
      %p36 = scmp.eq.s32.totalorder %s35, 0
      %s38 = sadd.s32 %s37, 1
      %s39 = scalar_select %p36, %s37, %s38
      %p42 = pneg %p36
      %p43 = scmp.eq.s32.totalorder %s13, 1
      %p44 = por %p42, %p43
      %p45 = scmp.ne.s32.totalorder %s37, %s40
      %p46 = scmp.eq.s32.totalorder %s13, 0
      %p47 = por %p45, %p46
      %p48 = scmp.ne.s32.totalorder %s37, %s40
      %p49 = scmp.eq.s32.totalorder %s18, 1
      %p50 = por %p48, %p49
      %p51 = scmp.ne.s32.totalorder %s40, %s41
      %p52 = scmp.eq.s32.totalorder %s18, 0
      %p53 = por %p51, %p52
      %p54 = scmp.ne.s32.totalorder %s40, %s41
      %p55 = scmp.eq.s32.totalorder %s19, 1
      %p56 = por %p54, %p55
      %p58 = scmp.ne.s32.totalorder %s41, %s57
      %p59 = scmp.eq.s32.totalorder %s19, 0
      %p60 = por %p58, %p59
      %s61 = ssub.s32 %s20, %s32
      %s62 = ssub.s32 %s21, %s28
      %s63 = sor.u32 %s61, %s62
      %p64 = scmp.eq.s32.totalorder %s63, 0
      %s66 = sadd.s32 %s65, 1
      %s67 = scalar_select %p64, %s65, %s66
      %p70 = pneg %p64
      %p71 = scmp.eq.s32.totalorder %s13, 1
      %p72 = por %p70, %p71
      %p73 = scmp.ne.s32.totalorder %s65, %s68
      %p74 = scmp.eq.s32.totalorder %s13, 0
      %p75 = por %p73, %p74
      %p76 = scmp.ne.s32.totalorder %s65, %s68
      %p77 = scmp.eq.s32.totalorder %s18, 1
      %p78 = por %p76, %p77
      %p79 = scmp.ne.s32.totalorder %s68, %s69
      %p80 = scmp.eq.s32.totalorder %s18, 0
      %p81 = por %p79, %p80
      %p82 = scmp.ne.s32.totalorder %s68, %s69
      %p83 = scmp.eq.s32.totalorder %s19, 1
      %p84 = por %p82, %p83
      %p86 = scmp.ne.s32.totalorder %s69, %s85
      %p87 = scmp.eq.s32.totalorder %s19, 0
      %p88 = por %p86, %p87
      %p89 = scmp.le.s32.totalorder 1, %s13
      %p90 = scmp.lt.s32.totalorder %s13, 3
      %p91 = pnand %p89, %p90
      %p92 = pneg %p91
      // Predicated region
      $region9: #{tpu_custom_call.1} parent=5 // pred_check
        _
      $region10: #{tpu_custom_call.1} parent=5 // pred_check_branch
        %94 = sbr.rel (%p91) target = $region12
      $region11: #{tpu_custom_call.1} parent=5 // pred_region
        %s95 = ssub.s32 %s13, 1
      $region12: #{tpu_custom_call.1} parent=5 // pred_fallthru
        _
      %p96 = scmp.lt.s32.totalorder %s13, 2
      // Predicated region
      $region13: #{tpu_custom_call.1} parent=5 // pred_check
        %p97 = pneg %p96
      $region14: #{tpu_custom_call.1} parent=5 // pred_check_branch
        %99 = sbr.rel (%p97) target = $region16
      $region15: #{tpu_custom_call.1} parent=5 // pred_region
        // Predicated region
        $region17: #{tpu_custom_call.1} parent=15 // pred_check
          %p100 = pneg %p47
        $region18: #{tpu_custom_call.1} parent=15 // pred_check_branch
          %102 = sbr.rel (%p100) target = $region20
        $region19: #{tpu_custom_call.1} parent=15 // pred_region
          %s103 = sand.u32 %s37, 1
          %s104 = scalar_lea.sflag [#allocation3], %s103
          %s105 = sand.u32 %s37, 1
          %s106 = smul.addr %s105, 32
          %s107 = scalar_lea.vmem [#allocation2], %s106
          %109 = vsyncadd %s104, 0
          %s110 = smul.addr %s20, 4
          %s111 = sadd.s32 %s21, %s110
          %s112 = smul.addr %s111, 8
          %s113 = scalar_lea.hbm %s0, %s112
          %s114 = sshll.u32 %s113, 4
          %s115 = int_to_ptr.hbm [resolvable:$true] %s114
          %s116 = sshll.u32 %s107, 4
          %s117 = int_to_ptr.vmem [resolvable:$true] %s116
          %122 = dma.hbm_to_vmem [thread:$0]  %s115, 512, %s117, %s104, 128, 128, 8
        $region20: #{tpu_custom_call.1} parent=15 // pred_fallthru
          _
      $region16: #{tpu_custom_call.1} parent=5 // pred_fallthru
        _
      %p123 = scmp.le.s32.totalorder 1, %s13
      %p124 = scmp.lt.s32.totalorder %s13, 3
      %p125 = pnand %p123, %p124
      %p126 = pneg %p125
      // Predicated region
      $region21: #{tpu_custom_call.1} parent=5 // pred_check
        _
      $region22: #{tpu_custom_call.1} parent=5 // pred_check_branch
        %128 = sbr.rel (%p125) target = $region24
      $region23: #{tpu_custom_call.1} parent=5 // pred_region
        %s129 = ssub.s32 %s13, 1
        %s130 = sand.u32 %s40, 1
        %s131 = scalar_lea.sflag [#allocation3], %s130
        %s132 = sand.u32 %s40, 1
        %s133 = smul.addr %s132, 32
        %s134 = scalar_lea.vmem [#allocation2], %s133
        // Predicated region
        $region25: #{tpu_custom_call.1} parent=23 // pred_check
          %p135 = pneg %p53
        $region26: #{tpu_custom_call.1} parent=23 // pred_check_branch
          %137 = sbr.rel (%p135) target = $region28
        $region27: #{tpu_custom_call.1} parent=23 // pred_region
          %139 = dma.done %s131, 512
        $region28: #{tpu_custom_call.1} parent=23 // pred_fallthru
          _
        %s140 = sand.u32 %s40, 1
        %s141 = scalar_lea.sflag [#allocation3], %s140
        %s142 = sand.u32 %s40, 1
        %s143 = smul.addr %s142, 32
        %s144 = scalar_lea.vmem [#allocation2], %s143
        %p145 = pneg %p53
        %p146 = pneg %p50
        %p147 = pneg %p81
        %p148 = pneg %p78
        %s149 = sand.u32 %s68, 1
        %s150 = scalar_lea.sflag [#allocation4], %s149
        %s151 = sand.u32 %s68, 1
        %s152 = smul.addr %s151, 64
        %s153 = scalar_lea.vmem [#allocation5], %s152
        %v154 = vlaneseq
        %v155 = vshrl.u32 %v154, 7
        %v156 = vadd.s32 %v155, 8
        %v157 = vadd.s32 %v155, 16
        %v158 = vadd.s32 %v155, 24
        %v159 = vlaneseq
        %v160 = vand.u32 %v159, 127
        %v161 = vmul.u32 %v160, 2
        %vm162 = vcmp.eq.s32.totalorder %v155, %v161
        %vm163 = vcmp.eq.s32.totalorder %v156, %v161
        %vm164 = vcmp.eq.s32.totalorder %v157, %v161
        %vm165 = vcmp.eq.s32.totalorder %v158, %v161
        %v166 = vsel %vm162, 1, 0
        %v167 = vsel %vm163, 1, 0
        %v168 = vsel %vm164, 1, 0
        %v169 = vsel %vm165, 1, 0
        %v170 = vcvt.s32.f32 %v166
        %v171 = vcvt.s32.f32 %v167
        %v172 = vcvt.s32.f32 %v168
        %v173 = vcvt.s32.f32 %v169
        %v174 = vld [vmem:[%s134] sm:$0xff]
        %v175 = vld [vmem:[%s134 + $0x8] sm:$0xff]
        %v176 = vld [vmem:[%s134 + $0x10] sm:$0xff]
        %v177 = vld [vmem:[%s134 + $0x18] sm:$0xff]
        %vm178 = vcmask 261120
        %v180 = vsel %vm178, %v174, 0
        %v183 = vsel %vm178, %v175, 0
        %v186 = vsel %vm178, %v176, 0
        %v189 = vsel %vm178, %v177, 0
        %191 = vmatpush.msra.mxu0 0.0
        %192 = vmatpush.msra.mxu0 0.0
        %193 = vmatpush.msra.mxu0 0.0
        %194 = vmatpush.msra.mxu0 0.0
        %195 = vmatpush.msra.mxu0 0.0
        %196 = vmatpush.msra.mxu0 0.0
        %197 = vmatpush.msra.mxu0 0.0
        %198 = vmatpush.msra.mxu0 0.0
        %199 = vmatpush.msra.mxu0 0.0
        %200 = vmatpush.msra.mxu0 0.0
        %201 = vmatpush.msra.mxu0 0.0
        %202 = vmatpush.msra.mxu0 0.0
        %203 = vmatpush.msra.mxu0 %v173
        %204 = vmatpush.msra.mxu0 %v172
        %205 = vmatpush.msra.mxu0 %v171
        %206 = vmatpush.msra.mxu0 %v170
        %207 = vmatmul.f32.gmra.mxu0 %v180
        %v208 = vpop.f32.mrf.mxu0
        %v209 = vadd.f32 0.0, %v208
        %210 = vmatmul.f32.gmra.mxu0 %v183
        %v211 = vpop.f32.mrf.mxu0
        %v212 = vadd.f32 0.0, %v211
        %213 = vmatmul.f32.gmra.mxu0 %v186
        %v214 = vpop.f32.mrf.mxu0
        %v215 = vadd.f32 0.0, %v214
        %216 = vmatmul.f32.gmra.mxu0 %v189
        %v217 = vpop.f32.mrf.mxu0
        %v218 = vadd.f32 0.0, %v217
        %219 = vdwg.mxu0
        %vm220 = vcmask 64512
        %221 = vst.msk [vmem:[%s153] sm:$0xff] %vm220, 0.0
        %222 = vst.msk [vmem:[%s153 + $0x8] sm:$0xff] %vm220, 0.0
        %s223 = scalar_lea.vmem %s153, 48 [#allocation5]
        %224 = vst.msk [vmem:[%s223] sm:$0xff] %vm220, 0.0
        %225 = vst.msk [vmem:[%s223 + $0x8] sm:$0xff] %vm220, 0.0
        %s226 = scalar_lea.vmem %s153, 16 [#allocation5]
        %227 = vst.msk [vmem:[%s226] sm:$0xff] %vm220, %v209
        %228 = vst.msk [vmem:[%s226 + $0x8] sm:$0xff] %vm220, %v212
        %229 = vst.msk [vmem:[%s226 + $0x10] sm:$0xff] %vm220, %v215
        %230 = vst.msk [vmem:[%s226 + $0x18] sm:$0xff] %vm220, %v218
        %s231 = sand.u32 %s68, 1
        %s232 = scalar_lea.sflag [#allocation4], %s231
        %s233 = sand.u32 %s68, 1
        %s234 = smul.addr %s233, 64
        %s235 = scalar_lea.vmem [#allocation5], %s234
        // Predicated region
        $region29: #{tpu_custom_call.1} parent=23 // pred_check
          %p236 = pneg %p78
        $region30: #{tpu_custom_call.1} parent=23 // pred_check_branch
          %238 = sbr.rel (%p236) target = $region32
        $region31: #{tpu_custom_call.1} parent=23 // pred_region
          %240 = vsyncadd %s232, 0
          %s241 = smul.addr %s22, 8
          %s242 = sadd.s32 %s23, %s241
          %s243 = smul.addr %s242, 8
          %s244 = scalar_lea.hbm %s1, %s243
          %s245 = sshll.u32 %s235, 4
          %s246 = int_to_ptr.vmem [resolvable:$true] %s245
          %s247 = sshll.u32 %s244, 4
          %s248 = int_to_ptr.hbm [resolvable:$true] %s247
          %253 = dma.vmem_to_hbm [thread:$0]  %s246, 1024, %s248, %s232, 128, 128, 8
        $region32: #{tpu_custom_call.1} parent=23 // pred_fallthru
          _
      $region24: #{tpu_custom_call.1} parent=5 // pred_fallthru
        _
      %p254 = scmp.le.s32.totalorder 2, %s13
      // Predicated region
      $region33: #{tpu_custom_call.1} parent=5 // pred_check
        %p255 = pneg %p254
      $region34: #{tpu_custom_call.1} parent=5 // pred_check_branch
        %257 = sbr.rel (%p255) target = $region36
      $region35: #{tpu_custom_call.1} parent=5 // pred_region
        %s258 = ssub.s32 %s13, 2
        // Predicated region
        $region37: #{tpu_custom_call.1} parent=35 // pred_check
          %p259 = pneg %p84
        $region38: #{tpu_custom_call.1} parent=35 // pred_check_branch
          %261 = sbr.rel (%p259) target = $region40
        $region39: #{tpu_custom_call.1} parent=35 // pred_region
          %s262 = sand.u32 %s69, 1
          %s263 = scalar_lea.sflag [#allocation4], %s262
          %s264 = sand.u32 %s69, 1
          %s265 = smul.addr %s264, 64
          %s266 = scalar_lea.vmem [#allocation5], %s265
          %268 = dma.done %s263, 1024
        $region40: #{tpu_custom_call.1} parent=35 // pred_fallthru
          _
      $region36: #{tpu_custom_call.1} parent=5 // pred_fallthru
        _
    $region6: #{tpu_custom_call.1} parent=1 // loop_footer
      %s17 = sadd.s32 1, %s13
    $region7: #{tpu_custom_call.1} parent=1 // loop_footer_branch
      %12 = sbr.rel target = $region3
    $region8: #{tpu_custom_call.1} parent=1 // loop_exit
      _
    %269 = vsyncpa [#allocation3], 1
    %s270 = scalar_lea.sflag [#allocation3], 1
    %271 = vsyncpa %s270, 1
    %272 = vsyncpa [#allocation4], 1
    %s273 = scalar_lea.sflag [#allocation4], 1
    %274 = vsyncpa %s273, 1

</llo_original>
